<compile_context>
chip_gen: v5e
topology: v5e:2x2
jax: 0.10.0
libtpu: 0.0.40
codegen_flags: <defaults>
</compile_context>

<pallas_src>
import functools

import jax
import jax.numpy as jnp
from jax import lax
from jax.experimental import pallas as pl
from jax.experimental.pallas import tpu as pltpu

LANE = 128           # output slab lane width (one full vreg lane extent)

QUERY_SIZE = 32      # must equal KEY_SIZE for q @ k^T to be well formed
KEY_SIZE = 32
VALUE_SIZE = 16
SCALE_FACTOR = 1.0
DROPOUT_P = 0.1

# contract last axis of lhs with last axis of rhs (x @ W^T without transpose)
_DN_LAST_LAST = (((1,), (1,)), ((), ()))


def _attn_kernel(x1_ref, x2_ref, x3_ref, wq_ref, wk_ref, wv_ref, bv_ref,
                 u_ref, slab_ref, *, scale_inv, dropout_p, out_dim, m2):
    bf16 = jnp.bfloat16
    f32 = jnp.float32

    def bdot(a, b):
        # bf16 MXU matmul with f32 accumulation, contracting last axes.
        return lax.dot_general(a.astype(bf16), b.astype(bf16),
                               _DN_LAST_LAST, preferred_element_type=f32)

    # q = x1 @ Wq^T, k = x2 @ Wk^T, v = x3 @ Wv^T + b   (weights in [out, in])
    q = bdot(x1_ref[...], wq_ref[...])
    k = bdot(x2_ref[...], wk_ref[...])
    v = bdot(x3_ref[...], wv_ref[...]) + bv_ref[...]

    # scaled qk (scale statically folded / skipped) and stable softmax
    qk = bdot(q, k)
    if scale_inv != 1.0:
        qk = qk * scale_inv
    m = jnp.max(qk, axis=-1, keepdims=True)
    e = jnp.exp(qk - m)
    sm = e * (1.0 / jnp.sum(e, axis=-1, keepdims=True))

    # dropout: zero with prob p; fold the 1/(1-p) survivor rescale into a
    # single multiply after the (small) output matmul.
    if dropout_p > 0.0:
        dropped = jnp.where(u_ref[...] >= dropout_p, sm, 0.0)
        rescale = 1.0 / (1.0 - dropout_p)
    else:
        dropped = sm
        rescale = 1.0

    out = jnp.dot(dropped.astype(bf16), v.astype(bf16),
                  preferred_element_type=f32)
    if rescale != 1.0:
        out = out * rescale

    # lane-dense packed output slab: [out | softmax_qk | zero pad] -> [M1, 128]
    rows = x1_ref.shape[0]
    slab_ref[:, 0:out_dim] = out
    slab_ref[:, out_dim:out_dim + m2] = sm
    slab_ref[:, out_dim + m2:] = jnp.zeros(
        (rows, slab_ref.shape[1] - out_dim - m2), f32)


@functools.partial(jax.jit, static_argnames=("scale_factor", "dropout_p"))
def model_forward(x1, x2, x3, wq, wk, wv, bv, dropout_rng,
                  scale_factor=SCALE_FACTOR, dropout_p=DROPOUT_P):
    """Mirrors Model.forward; returns (output, softmax_qk)."""
    m1 = x1.shape[0]
    m2 = x2.shape[0]
    out_dim = wv.shape[0]          # == query_size
    assert out_dim + m2 <= LANE, "packed slab assumes out_dim + m2 <= 128"

    # dropout randomness generated outside the kernel (portable; the kernel
    # itself stays free of TPU-only PRNG primitives).
    u = jax.random.uniform(dropout_rng, (m1, m2), dtype=jnp.float32)
    bv_row = bv.reshape(1, -1)

    kernel = functools.partial(
        _attn_kernel,
        scale_inv=float(1.0 / scale_factor),
        dropout_p=float(dropout_p),
        out_dim=out_dim,
        m2=m2,
    )

    vmem = pl.BlockSpec(memory_space=pltpu.MemorySpace.VMEM)
    slab = pl.pallas_call(
        kernel,
        out_shape=jax.ShapeDtypeStruct((m1, LANE), jnp.float32),
        in_specs=[vmem] * 8,
        out_specs=vmem,
    )(x1, x2, x3, wq, wk, wv, bv_row, u)

    out = slab[:, :out_dim]
    sm = slab[:, out_dim:out_dim + m2]
    return out, sm


if __name__ == "__main__":
    key = jax.random.PRNGKey(0)
    k_x1, k_x2, k_x3, k_wq, k_wk, k_wv, k_bv, k_drop = jax.random.split(key, 8)

    M1, M2 = 8, 16

    # inputs (row-major 2D, like the PyTorch x1/x2/x3)
    x1 = jax.random.normal(k_x1, (M1, QUERY_SIZE), dtype=jnp.float32)
    x2 = jax.random.normal(k_x2, (M2, KEY_SIZE), dtype=jnp.float32)
    x3 = jax.random.normal(k_x3, (M2, VALUE_SIZE), dtype=jnp.float32)

    # parameters in PyTorch Linear layout: weight = [out_features, in_features]
    wq = 0.1 * jax.random.normal(k_wq, (KEY_SIZE, QUERY_SIZE), dtype=jnp.float32)
    wk = 0.1 * jax.random.normal(k_wk, (QUERY_SIZE, KEY_SIZE), dtype=jnp.float32)
    wv = 0.1 * jax.random.normal(k_wv, (QUERY_SIZE, VALUE_SIZE), dtype=jnp.float32)
    bv = 0.1 * jax.random.normal(k_bv, (QUERY_SIZE,), dtype=jnp.float32)

    out, sm = model_forward(x1, x2, x3, wq, wk, wv, bv, k_drop)
    out, sm = jax.block_until_ready((out, sm))

    # pure-JAX reference mirroring the kernel math (bf16 matmuls, f32 acc)
    bf16 = jnp.bfloat16

    def bdot_ref(a, b):
        return lax.dot_general(a.astype(bf16), b.astype(bf16),
                               _DN_LAST_LAST, preferred_element_type=jnp.float32)

    q_r = bdot_ref(x1, wq)
    k_r = bdot_ref(x2, wk)
    v_r = bdot_ref(x3, wv) + bv[None, :]
    qk_r = bdot_ref(q_r, k_r) * (1.0 / SCALE_FACTOR)
    sm_r = jax.nn.softmax(qk_r, axis=-1)
    u_r = jax.random.uniform(k_drop, (M1, M2), dtype=jnp.float32)
    dropped_r = jnp.where(u_r >= DROPOUT_P, sm_r, 0.0)
    out_r = jnp.dot(dropped_r.astype(bf16), v_r.astype(bf16),
                    preferred_element_type=jnp.float32) * (1.0 / (1.0 - DROPOUT_P))

    assert out.shape == (M1, QUERY_SIZE)
    assert sm.shape == (M1, M2)
    assert bool(jnp.all(jnp.isfinite(out)))
    assert bool(jnp.allclose(sm, sm_r, rtol=2e-3, atol=2e-3))
    assert bool(jnp.allclose(out, out_r, rtol=2e-2, atol=2e-2))

    print("KERNEL_OK")
</pallas_src>

<mosaic_0001>
module attributes {stable_mosaic.version = 11 : i64} {
  func.func @_attn_kernel(%arg0: memref<8x32xf32, #tpu.memory_space<vmem>>, %arg1: memref<16x32xf32, #tpu.memory_space<vmem>>, %arg2: memref<16x16xf32, #tpu.memory_space<vmem>>, %arg3: memref<32x32xf32, #tpu.memory_space<vmem>>, %arg4: memref<32x32xf32, #tpu.memory_space<vmem>>, %arg5: memref<32x16xf32, #tpu.memory_space<vmem>>, %arg6: memref<1x32xf32, #tpu.memory_space<vmem>>, %arg7: memref<8x16xf32, #tpu.memory_space<vmem>>, %arg8: memref<8x128xf32, #tpu.memory_space<vmem>>) attributes {dimension_semantics = [], scalar_prefetch = 0 : i64, scratch_operands = 0 : i64, tpu.core_type = #tpu.core_type<tc>} {
    %c0 = arith.constant 0 : index
    %c0_0 = arith.constant 0 : index
    %0 = vector.load %arg0[%c0, %c0_0] : memref<8x32xf32, #tpu.memory_space<vmem>>, vector<8x32xf32>
    %c0_1 = arith.constant 0 : index
    %c0_2 = arith.constant 0 : index
    %1 = vector.load %arg3[%c0_1, %c0_2] : memref<32x32xf32, #tpu.memory_space<vmem>>, vector<32x32xf32>
    %2 = arith.truncf %0 : vector<8x32xf32> to vector<8x32xbf16>
    %3 = arith.truncf %1 : vector<32x32xf32> to vector<32x32xbf16>
    %cst = arith.constant dense<0.000000e+00> : vector<8x32xf32>
    %4 = tpu.matmul %2, %3, %cst {dimension_numbers = #tpu.dot_dimension_numbers<[1], [1], [0], [0], [0, 0, 1, 0], [], []>} : vector<8x32xbf16>, vector<32x32xbf16>, vector<8x32xf32> -> vector<8x32xf32>
    %c0_3 = arith.constant 0 : index
    %c0_4 = arith.constant 0 : index
    %5 = vector.load %arg1[%c0_3, %c0_4] : memref<16x32xf32, #tpu.memory_space<vmem>>, vector<16x32xf32>
    %c0_5 = arith.constant 0 : index
    %c0_6 = arith.constant 0 : index
    %6 = vector.load %arg4[%c0_5, %c0_6] : memref<32x32xf32, #tpu.memory_space<vmem>>, vector<32x32xf32>
    %7 = arith.truncf %5 : vector<16x32xf32> to vector<16x32xbf16>
    %8 = arith.truncf %6 : vector<32x32xf32> to vector<32x32xbf16>
    %cst_7 = arith.constant dense<0.000000e+00> : vector<16x32xf32>
    %9 = tpu.matmul %7, %8, %cst_7 {dimension_numbers = #tpu.dot_dimension_numbers<[1], [1], [0], [0], [0, 0, 1, 0], [], []>} : vector<16x32xbf16>, vector<32x32xbf16>, vector<16x32xf32> -> vector<16x32xf32>
    %c0_8 = arith.constant 0 : index
    %c0_9 = arith.constant 0 : index
    %10 = vector.load %arg2[%c0_8, %c0_9] : memref<16x16xf32, #tpu.memory_space<vmem>>, vector<16x16xf32>
    %c0_10 = arith.constant 0 : index
    %c0_11 = arith.constant 0 : index
    %11 = vector.load %arg5[%c0_10, %c0_11] : memref<32x16xf32, #tpu.memory_space<vmem>>, vector<32x16xf32>
    %12 = arith.truncf %10 : vector<16x16xf32> to vector<16x16xbf16>
    %13 = arith.truncf %11 : vector<32x16xf32> to vector<32x16xbf16>
    %cst_12 = arith.constant dense<0.000000e+00> : vector<16x32xf32>
    %14 = tpu.matmul %12, %13, %cst_12 {dimension_numbers = #tpu.dot_dimension_numbers<[1], [1], [0], [0], [0, 0, 1, 0], [], []>} : vector<16x16xbf16>, vector<32x16xbf16>, vector<16x32xf32> -> vector<16x32xf32>
    %c0_13 = arith.constant 0 : index
    %c0_14 = arith.constant 0 : index
    %15 = vector.load %arg6[%c0_13, %c0_14] : memref<1x32xf32, #tpu.memory_space<vmem>>, vector<1x32xf32>
    %16 = vector.broadcast %15 : vector<1x32xf32> to vector<16x32xf32>
    %17 = arith.addf %14, %16 : vector<16x32xf32>
    %18 = arith.truncf %4 : vector<8x32xf32> to vector<8x32xbf16>
    %19 = arith.truncf %9 : vector<16x32xf32> to vector<16x32xbf16>
    %cst_15 = arith.constant dense<0.000000e+00> : vector<8x16xf32>
    %20 = tpu.matmul %18, %19, %cst_15 {dimension_numbers = #tpu.dot_dimension_numbers<[1], [1], [0], [0], [0, 0, 1, 0], [], []>} : vector<8x32xbf16>, vector<16x32xbf16>, vector<8x16xf32> -> vector<8x16xf32>
    %cst_16 = arith.constant dense<0xFF800000> : vector<8xf32>
    %21 = vector.multi_reduction <maximumf>, %20, %cst_16 [1] : vector<8x16xf32> to vector<8xf32>
    %22 = vector.shape_cast %21 : vector<8xf32> to vector<8x1xf32>
    %23 = vector.broadcast %22 : vector<8x1xf32> to vector<8x16xf32>
    %24 = arith.subf %20, %23 : vector<8x16xf32>
    %25 = math.exp %24 : vector<8x16xf32>
    %cst_17 = arith.constant dense<0.000000e+00> : vector<8xf32>
    %26 = vector.multi_reduction <add>, %25, %cst_17 [1] : vector<8x16xf32> to vector<8xf32>
    %27 = vector.shape_cast %26 : vector<8xf32> to vector<8x1xf32>
    %cst_18 = arith.constant 1.000000e+00 : f32
    %28 = vector.broadcast %cst_18 : f32 to vector<8x1xf32>
    %29 = arith.divf %28, %27 : vector<8x1xf32>
    %30 = vector.broadcast %29 : vector<8x1xf32> to vector<8x16xf32>
    %31 = arith.mulf %25, %30 : vector<8x16xf32>
    %c0_19 = arith.constant 0 : index
    %c0_20 = arith.constant 0 : index
    %32 = vector.load %arg7[%c0_19, %c0_20] : memref<8x16xf32, #tpu.memory_space<vmem>>, vector<8x16xf32>
    %cst_21 = arith.constant 1.000000e-01 : f32
    %33 = vector.broadcast %cst_21 : f32 to vector<8x16xf32>
    %34 = arith.cmpf oge, %32, %33 : vector<8x16xf32>
    %cst_22 = arith.constant 0.000000e+00 : f32
    %35 = vector.broadcast %cst_22 : f32 to vector<8x16xf32>
    %36 = arith.select %34, %31, %35 : vector<8x16xi1>, vector<8x16xf32>
    %37 = arith.truncf %36 : vector<8x16xf32> to vector<8x16xbf16>
    %38 = arith.truncf %17 : vector<16x32xf32> to vector<16x32xbf16>
    %cst_23 = arith.constant dense<0.000000e+00> : vector<8x32xf32>
    %39 = tpu.matmul %37, %38, %cst_23 {dimension_numbers = #tpu.dot_dimension_numbers<[1], [0], [0], [1], [0, 0, 1, 1], [], []>} : vector<8x16xbf16>, vector<16x32xbf16>, vector<8x32xf32> -> vector<8x32xf32>
    %cst_24 = arith.constant 1.11111116 : f32
    %40 = vector.broadcast %cst_24 : f32 to vector<8x32xf32>
    %41 = arith.mulf %39, %40 : vector<8x32xf32>
    %c0_25 = arith.constant 0 : index
    %c0_26 = arith.constant 0 : index
    %42 = vector.load %arg8[%c0_25, %c0_26] : memref<8x128xf32, #tpu.memory_space<vmem>>, vector<8x32xf32>
    tpu.vector_store %arg8[%c0_25, %c0_26], %41 {strides = array<i32>} : memref<8x128xf32, #tpu.memory_space<vmem>>, vector<8x32xf32>,
    %c0_27 = arith.constant 0 : index
    %c32 = arith.constant 32 : index
    %43 = vector.load %arg8[%c0_27, %c32] : memref<8x128xf32, #tpu.memory_space<vmem>>, vector<8x16xf32>
    tpu.vector_store %arg8[%c0_27, %c32], %31 {strides = array<i32>} : memref<8x128xf32, #tpu.memory_space<vmem>>, vector<8x16xf32>,
    %cst_28 = arith.constant 0.000000e+00 : f32
    %44 = vector.broadcast %cst_28 : f32 to vector<8x80xf32>
    %c0_29 = arith.constant 0 : index
    %c48 = arith.constant 48 : index
    %45 = vector.load %arg8[%c0_29, %c48] : memref<8x128xf32, #tpu.memory_space<vmem>>, vector<8x80xf32>
    tpu.vector_store %arg8[%c0_29, %c48], %44 {strides = array<i32>} : memref<8x128xf32, #tpu.memory_space<vmem>>, vector<8x80xf32>,
    return
  }
}

</mosaic_0001>

<llo_original>
// kernel: model_forward.1
$region0: #{model_forward.1}
  #allocation0 [shape = 'u32[]', space=smem, size = 0x4, offset = 0x4, fixed_abs, tag = 'smem constant byte address 0x4 - core index']
  #allocation1 [shape = 'u32[72,128]{1,0:T(1,128)}', space=vmem, size = 0x9000, scoped, tag = 'internal scratch']
  %s0 = inlined_call_operand.vmem [shape: f32[8,32], index: 0, kind: input, shape index: {}]
  %s1 = inlined_call_operand.vmem [shape: f32[16,32], index: 1, kind: input, shape index: {}]
  %s2 = inlined_call_operand.hbm [shape: f32[16,16], index: 2, kind: input, shape index: {}]
  %s3 = inlined_call_operand.vmem [shape: f32[32,32], index: 3, kind: input, shape index: {}]
  %s4 = inlined_call_operand.hbm [shape: f32[32,32], index: 4, kind: input, shape index: {}]
  %s5 = inlined_call_operand.vmem [shape: f32[32,16], index: 5, kind: input, shape index: {}]
  %s6 = inlined_call_operand.vmem [shape: f32[1,32], index: 6, kind: input, shape index: {}]
  %s7 = inlined_call_operand.vmem [shape: f32[8,16], index: 7, kind: input, shape index: {}]
  %s8 = inlined_call_operand.vmem [shape: f32[8,128], index: 8, kind: output, shape index: {}]
  %s9 = sld [smem:[#allocation0]]
  $region50: #{model_forward.1} parent=0
    _
  %s11 = ssub.s32 1, %s9
  %s12 = scalar_select 0, %s11, %s9
  $region1: #{model_forward.1} parent=0
    #allocation2 [shape = 'u8[8192]{0}', space=vmem, size = 0x2000, scoped, tag = 'input window, operand 2, single buffered']
    #allocation3 [shape = 's32[1]{0}', space=sflag, size = 0x4, scoped, tag = 'scoped memory for model_forward.1']
    #allocation4 [shape = 'u8[16384]{0}', space=vmem, size = 0x4000, scoped, tag = 'input window, operand 4, single buffered']
    #allocation5 [shape = 's32[1]{0}', space=sflag, size = 0x4, scoped, tag = 'scoped memory for model_forward.1']
    %13 = vsyncpa [#allocation3], 0
    %14 = vsyncpa [#allocation5], 0
    // Predicated region
    $region2: #{model_forward.1} parent=1 // pred_check
      _
    $region3: #{model_forward.1} parent=1 // pred_check_branch
      %16 = sbr.rel (0) target = $region5
    $region4: #{model_forward.1} parent=1 // pred_region
      _
    $region5: #{model_forward.1} parent=1 // pred_fallthru
      _
    // Predicated region
    $region6: #{model_forward.1} parent=1 // pred_check
      _
    $region7: #{model_forward.1} parent=1 // pred_check_branch
      %18 = sbr.rel (0) target = $region9
    $region8: #{model_forward.1} parent=1 // pred_region
      _
    $region9: #{model_forward.1} parent=1 // pred_fallthru
      _
    // Predicated region
    $region10: #{model_forward.1} parent=1 // pred_check
      _
    $region11: #{model_forward.1} parent=1 // pred_check_branch
      %20 = sbr.rel (0) target = $region13
    $region12: #{model_forward.1} parent=1 // pred_region
      %22 = vsyncadd [#allocation3], 0
      %s23 = sshll.u32 %s2, 4
      %s24 = int_to_ptr.hbm [resolvable:$true] %s23
      %s25 = sshll.u32 [#allocation2], 4
      %s26 = int_to_ptr.vmem [resolvable:$true] %s25
      %31 = dma.hbm_to_vmem [thread:$0]  %s24, 256, %s26, [#allocation3], 128, 128, 8
    $region13: #{model_forward.1} parent=1 // pred_fallthru
      _
    // Predicated region
    $region14: #{model_forward.1} parent=1 // pred_check
      _
    $region15: #{model_forward.1} parent=1 // pred_check_branch
      %33 = sbr.rel (0) target = $region17
    $region16: #{model_forward.1} parent=1 // pred_region
      _
    $region17: #{model_forward.1} parent=1 // pred_fallthru
      _
    // Predicated region
    $region18: #{model_forward.1} parent=1 // pred_check
      _
    $region19: #{model_forward.1} parent=1 // pred_check_branch
      %35 = sbr.rel (0) target = $region21
    $region20: #{model_forward.1} parent=1 // pred_region
      %37 = vsyncadd [#allocation5], 0
      %s38 = sshll.u32 %s4, 4
      %s39 = int_to_ptr.hbm [resolvable:$true] %s38
      %s40 = sshll.u32 [#allocation4], 4
      %s41 = int_to_ptr.vmem [resolvable:$true] %s40
      %46 = dma.hbm_to_vmem [thread:$0]  %s39, 512, %s41, [#allocation5], 128, 128, 8
    $region21: #{model_forward.1} parent=1 // pred_fallthru
      _
    // Predicated region
    $region22: #{model_forward.1} parent=1 // pred_check
      _
    $region23: #{model_forward.1} parent=1 // pred_check_branch
      %48 = sbr.rel (0) target = $region25
    $region24: #{model_forward.1} parent=1 // pred_region
      _
    $region25: #{model_forward.1} parent=1 // pred_fallthru
      _
    // Predicated region
    $region26: #{model_forward.1} parent=1 // pred_check
      _
    $region27: #{model_forward.1} parent=1 // pred_check_branch
      %50 = sbr.rel (0) target = $region29
    $region28: #{model_forward.1} parent=1 // pred_region
      _
    $region29: #{model_forward.1} parent=1 // pred_fallthru
      _
    // Predicated region
    $region30: #{model_forward.1} parent=1 // pred_check
      _
    $region31: #{model_forward.1} parent=1 // pred_check_branch
      %52 = sbr.rel (0) target = $region33
    $region32: #{model_forward.1} parent=1 // pred_region
      _
    $region33: #{model_forward.1} parent=1 // pred_fallthru
      _
    // Predicated region
    $region34: #{model_forward.1} parent=1 // pred_check
      _
    $region35: #{model_forward.1} parent=1 // pred_check_branch
      %54 = sbr.rel (0) target = $region37
    $region36: #{model_forward.1} parent=1 // pred_region
      %56 = dma.done [#allocation3], 256
    $region37: #{model_forward.1} parent=1 // pred_fallthru
      _
    // Predicated region
    $region38: #{model_forward.1} parent=1 // pred_check
      _
    $region39: #{model_forward.1} parent=1 // pred_check_branch
      %58 = sbr.rel (0) target = $region41
    $region40: #{model_forward.1} parent=1 // pred_region
      %60 = dma.done [#allocation5], 512
    $region41: #{model_forward.1} parent=1 // pred_fallthru
      _
    %v62 = vld [vmem:[%s0] sm:$0xff]
    %v63 = vld [vmem:[%s3] sm:$0xff]
    %v64 = vld [vmem:[%s3 + $0x8] sm:$0xff]
    %v65 = vld [vmem:[%s3 + $0x10] sm:$0xff]
    %v66 = vld [vmem:[%s3 + $0x18] sm:$0xff]
    %v67 = vpack.c.bf16 %v62, %v62
    %v68 = vpack.c.bf16 %v64, %v63
    %v69 = vpack.c.bf16 %v66, %v65
    %vm70 = vcmask 261120
    %v72 = vsel %vm70, %v67, 0
    %v75 = vsel %vm70, %v68, 0
    %v78 = vsel %vm70, %v69, 0
    %80 = vmatpush.bf16.xpose.msra.mxu0 0
    %81 = vmatpush.bf16.xpose.msra.mxu0 0
    %82 = vmatpush.bf16.xpose.msra.mxu0 0
    %83 = vmatpush.bf16.xpose.msra.mxu0 0
    %84 = vmatpush.bf16.xpose.msra.mxu0 0
    %85 = vmatpush.bf16.xpose.msra.mxu0 0
    %86 = vmatpush.bf16.xpose.msra.mxu0 %v78
    %87 = vmatpush.bf16.xpose.msra.mxu0 %v75
    %88 = vmatmul.bf16.gmra.mxu0 %v72
    %v89 = vpop.f32.mrf.mxu0
    %v90 = vadd.f32 0.0, %v89
    %v91 = vpop.f32.mrf.mxu0
    %92 = vdwg.mxu0
    %v93 = vld [vmem:[%s1] sm:$0xff]
    %v94 = vld [vmem:[%s1 + $0x8] sm:$0xff]
    %v95 = vld [vmem:[#allocation4] sm:$0xff]
    %v96 = vld [vmem:[#allocation4 + $0x8] sm:$0xff]
    %v97 = vld [vmem:[#allocation4 + $0x10] sm:$0xff]
    %v98 = vld [vmem:[#allocation4 + $0x18] sm:$0xff]
    %v99 = vpack.c.bf16 %v94, %v93
    %v100 = vpack.c.bf16 %v96, %v95
    %v101 = vpack.c.bf16 %v98, %v97
    %v103 = vsel %vm70, %v99, 0
    %v106 = vsel %vm70, %v100, 0
    %v109 = vsel %vm70, %v101, 0
    %111 = vmatpush.bf16.xpose.msra.mxu0 0
    %112 = vmatpush.bf16.xpose.msra.mxu0 0
    %113 = vmatpush.bf16.xpose.msra.mxu0 0
    %114 = vmatpush.bf16.xpose.msra.mxu0 0
    %115 = vmatpush.bf16.xpose.msra.mxu0 0
    %116 = vmatpush.bf16.xpose.msra.mxu0 0
    %117 = vmatpush.bf16.xpose.msra.mxu0 %v109
    %118 = vmatpush.bf16.xpose.msra.mxu0 %v106
    %119 = vmatmul.bf16.gmra.mxu0 %v103
    %v120 = vpop.f32.mrf.mxu0
    %v121 = vadd.f32 0.0, %v120
    %v122 = vpop.f32.mrf.mxu0
    %v123 = vadd.f32 0.0, %v122
    %124 = vdwg.mxu0
    %v125 = vld [vmem:[#allocation2] sm:$0xff]
    %v126 = vld [vmem:[#allocation2 + $0x8] sm:$0xff]
    %v127 = vld [vmem:[%s5] sm:$0xff]
    %v128 = vld [vmem:[%s5 + $0x8] sm:$0xff]
    %v129 = vld [vmem:[%s5 + $0x10] sm:$0xff]
    %v130 = vld [vmem:[%s5 + $0x18] sm:$0xff]
    %v131 = vpack.c.bf16 %v126, %v125
    %v132 = vpack.c.bf16 %v128, %v127
    %v133 = vpack.c.bf16 %v130, %v129
    %v134 = vld [vmem:[%s6] sm:$0x1]
    %v136 = vperm.slane %v134, 0
    %vm138 = vcmask 130048
    %v140 = vsel %vm138, %v131, 0
    %v143 = vsel %vm138, %v132, 0
    %v146 = vsel %vm138, %v133, 0
    %148 = vmatpush.bf16.xpose.msra.mxu0 0
    %149 = vmatpush.bf16.xpose.msra.mxu0 0
    %150 = vmatpush.bf16.xpose.msra.mxu0 0
    %151 = vmatpush.bf16.xpose.msra.mxu0 0
    %152 = vmatpush.bf16.xpose.msra.mxu0 0
    %153 = vmatpush.bf16.xpose.msra.mxu0 0
    %154 = vmatpush.bf16.xpose.msra.mxu0 %v146
    %155 = vmatpush.bf16.xpose.msra.mxu0 %v143
    %156 = vmatmul.bf16.gmra.mxu0 %v140
    %v157 = vpop.f32.mrf.mxu0
    %v158 = vadd.f32 %v136, %v157
    %v159 = vpop.f32.mrf.mxu0
    %v160 = vadd.f32 %v136, %v159
    %161 = vdwg.mxu0
    %v162 = vpack.c.bf16 %v90, %v90
    %v163 = vpack.c.bf16 %v123, %v121
    %v165 = vsel %vm70, %v162, 0
    %v168 = vsel %vm70, %v163, 0
    %170 = vmatpush.bf16.xpose.msra.mxu0 0
    %171 = vmatpush.bf16.xpose.msra.mxu0 0
    %172 = vmatpush.bf16.xpose.msra.mxu0 0
    %173 = vmatpush.bf16.xpose.msra.mxu0 0
    %174 = vmatpush.bf16.xpose.msra.mxu0 0
    %175 = vmatpush.bf16.xpose.msra.mxu0 0
    %176 = vmatpush.bf16.xpose.msra.mxu0 0
    %177 = vmatpush.bf16.xpose.msra.mxu0 %v168
    %178 = vmatmul.bf16.gmra.mxu0 %v165
    %v179 = vpop.f32.mrf.mxu0
    %v180 = vadd.f32 0.0, %v179
    %v181 = vpop.f32.mrf.mxu0
    %182 = vdwg.mxu0
    %v183 = vsel %vm138, %v180, -inf
    %184 = vmax.xlane.f32.xlu0 %v183
    %v185 = vpop.xlane.xlu0 %184
    %v186 = vsub.f32 %v180, %v185
    %v187 = vmul.f32 %v186, 1.442695
    %v188 = vpow.pop %v187
    %v189 = vsel %vm138, %v188, 0.0
    %190 = vadd.xlane.f32.xlu0 %v189
    %v191 = vpop.xlane.xlu0 %190
    %v192 = vrcp.pop %v191
    %v193 = vmul.f32 %v191, %v192
    %v194 = vsub.f32 1.0, %v193
    %v195 = vmul.f32 %v192, %v194
    %v196 = vadd.f32 %v192, %v195
    %vm197 = vweird.f32 %v191
    %vm198 = vweird.f32 %v192
    %vm199 = vmor %vm197, %vm198
    %v200 = vsel %vm199, %v192, %v196
    %v201 = vand.u32 2147483647, %v191
    %vm202 = vcmp.eq.f32.partialorder %v201, 8.507059e+37
    %v203 = vand.u32 %v191, 2147483648
    %v204 = vor.u32 1.1754944e-38, %v203
    %v205 = vsel %vm202, %v204, %v200
    %v206 = vmul.f32 1.0, %v205
    %v207 = vmul.f32 %v188, %v206
    %v208 = vld [vmem:[%s7] sm:$0xff]
    %vm209 = vcmp.ge.f32.partialorder %v208, 0.1
    %v210 = vsel %vm209, %v207, 0.0
    %v211 = vpack.c.bf16 %v210, %v210
    %v212 = vpack.c.bf16 %v160, %v158
    %v214 = vsel %vm138, %v211, 0
    %216 = vmatpush.bf16.msra.mxu0 0
    %217 = vmatpush.bf16.msra.mxu0 0
    %218 = vmatpush.bf16.msra.mxu0 0
    %219 = vmatpush.bf16.msra.mxu0 0
    %220 = vmatpush.bf16.msra.mxu0 0
    %221 = vmatpush.bf16.msra.mxu0 0
    %222 = vmatpush.bf16.msra.mxu0 0
    %223 = vmatpush.bf16.msra.mxu0 %v212
    %224 = vmatmul.bf16.gmra.mxu0 %v214
    %v225 = vpop.f32.mrf.mxu0
    %v226 = vadd.f32 0.0, %v225
    %v227 = vpop.f32.mrf.mxu0
    %228 = vdwg.mxu0
    %v229 = vmul.f32 %v226, 1.1111112
    %230 = vst.msk [vmem:[%s8] sm:$0xff] %vm70, %v229
    %232 = vrot.lane.b32.xlu0 %v207, 32
    %v233 = vpop.permute.xlu0 %232
    %vm235 = vcmask 392448
    %236 = vst.msk [vmem:[%s8] sm:$0xff] %vm235, %v233
    %vm237 = vcmask 1047936
    %238 = vst.msk [vmem:[%s8] sm:$0xff] %vm237, 0.0
    // Predicated region
    $region42: #{model_forward.1} parent=1 // pred_check
      _
    $region43: #{model_forward.1} parent=1 // pred_check_branch
      %240 = sbr.rel (0) target = $region45
    $region44: #{model_forward.1} parent=1 // pred_region
      _
    $region45: #{model_forward.1} parent=1 // pred_fallthru
      _
    // Predicated region
    $region46: #{model_forward.1} parent=1 // pred_check
      _
    $region47: #{model_forward.1} parent=1 // pred_check_branch
      %242 = sbr.rel (0) target = $region49
    $region48: #{model_forward.1} parent=1 // pred_region
      _
    $region49: #{model_forward.1} parent=1 // pred_fallthru
      _
    %243 = vsyncpa [#allocation3], 1
    %244 = vsyncpa [#allocation5], 1

</llo_original>
